<compile_context>
chip_gen: v7x
topology: tpu7x:2x2x1
jax: 0.10.0
libtpu: 0.0.40
codegen_flags: <defaults>
</compile_context>

<pallas_src>
import jax
import jax.numpy as jnp
from jax import lax
from jax.experimental import pallas as pl
from jax.experimental.pallas import tpu as pltpu

MAX_ROWS_PER_STEP = 8192  # gathered embedding rows per grid step


def _round_up(x, m):
    return ((x + m - 1) // m) * m


def _block_diag(table, pack):
    """Replicate `table` (V, D) into a block-diagonal (pack*V, pack*D) matrix."""
    if pack == 1:
        return table
    V, D = table.shape
    out = jnp.zeros((pack * V, pack * D), table.dtype)
    for j in range(pack):
        out = out.at[j * V:(j + 1) * V, j * D:(j + 1) * D].set(table)
    return out


def _embed_onehot_kernel(ids_ref, rep_ref, tab_ref, out_ref):
    # ids_ref : VMEM (rb, kp) int32   -- pre-shifted ids (id + j*V) in cols [0,pack), 0-padded to kp
    # rep_ref : VMEM (kp, pack*V) f32 -- replication matrix rep[j, c] = (c // V == j) for j < pack
    # tab_ref : VMEM (pack*V, pack*D) -- resident block-diagonal embedding table
    # out_ref : VMEM (rb, pack*D)     -- lane-dense gathered rows
    rb = ids_ref.shape[0]
    kdim = tab_ref.shape[0]                       # pack * V

    # 1) Lane-replicate the pre-shifted ids across their V-wide blocks with one tiny
    #    MXU matmul (keeps the binding VALU slot free):
    #    ids_rep[r, c] = shifted_id[r, c // V]   (exact: ids < pack*V << 2**24 in f32)
    ids_f = ids_ref[...].astype(jnp.float32)      # (rb, kp), tiny
    ids_rep = jnp.dot(ids_f, rep_ref[...], preferred_element_type=jnp.float32)

    # 2) ONE full-width compare + ONE cast builds the one-hot
    #    (previously: pack compares + pack casts + pack adds on the saturating VPU slot).
    col = lax.broadcasted_iota(jnp.int32, (rb, kdim), 1)
    onehot = (col == ids_rep.astype(jnp.int32)).astype(tab_ref.dtype)

    # 3) One MXU matmul gathers all rows for this block, packed lane-dense.
    out_ref[...] = jnp.dot(
        onehot, tab_ref[...], preferred_element_type=jnp.float32
    ).astype(out_ref.dtype)


def author_layer_forward(ids, table):
    """Pallas equivalent of Authorlayer.forward: embedding(ids).reshape(-1, D)."""
    V, D = table.shape
    dt = jnp.dtype(table.dtype)

    # Lane packing factor: `pack` gathered rows side by side per 128-lane output row.
    # (On v6e/v7x, 256 // D would fill the 2x256 MXU; 128 is the safe chip-agnostic
    #  choice and is already the native width on v5e.)
    if D < 128 and 128 % D == 0:
        pack = 128 // D
    else:
        pack = 1  # TODO(synk): D not dividing 128 -> lane-masked output stores (perf cliff only)

    flat_ids = ids.reshape(-1).astype(jnp.int32)
    # Clamp so out-of-range ids can't alias a neighbouring diagonal block.
    # (PyTorch nn.Embedding would raise for invalid ids; valid ids are unaffected.)
    flat_ids = jnp.clip(flat_ids, 0, V - 1)
    n = flat_ids.shape[0]

    # Block sizing: large blocks amortize per-step pipeline overhead, but keep >= 2
    # grid steps when there is enough work so "parallel" shards across v7x's 2 TCs.
    align = pack * 8                                   # keep packed rows sublane-aligned
    n_align = _round_up(max(n, 1), align)
    if n_align >= 2 * align:
        target_block = _round_up((n_align + 1) // 2, align)
    else:
        target_block = n_align
    row_block = min(MAX_ROWS_PER_STEP, target_block)
    n_pad = _round_up(n_align, row_block)

    flat_ids = jnp.pad(flat_ids, (0, n_pad - n))       # pad with id 0; sliced off below

    # Pre-shift ids into their diagonal block (wrapper-side, free at kernel time), and
    # pad the id width to kp >= 8 so the replication matmul's K is sublane-aligned.
    kp = _round_up(pack, 8)
    ids2d = flat_ids.reshape(n_pad // pack, pack)
    ids2d = ids2d + (jnp.arange(pack, dtype=jnp.int32) * V)[None, :]
    if kp > pack:
        ids2d = jnp.pad(ids2d, ((0, 0), (0, kp - pack)))

    # Replication matrix: rep[j, c] = 1 if c // V == j (rows >= pack are zero padding).
    rep = (jnp.arange(pack * V, dtype=jnp.int32)[None, :] // V
           == jnp.arange(kp, dtype=jnp.int32)[:, None]).astype(jnp.float32)

    table_bd = _block_diag(table, pack)                # (pack*V, pack*D), VMEM-resident
    # NOTE: table/rep index_maps are constant -> copied once. For very large V, add
    # pipeline_mode=pl.Buffered(1), raise vmem_limit_bytes, or tile the vocab axis.

    rb = row_block // pack
    grid = (n_pad // row_block,)

    cost = pl.CostEstimate(
        flops=int(2 * (n_pad // pack) * (pack * V) * (pack * D)       # gather matmul
                  + 2 * (n_pad // pack) * kp * (pack * V)),           # id replication matmul
        transcendentals=0,
        bytes_accessed=int(
            n_pad * D * dt.itemsize                 # output
            + (n_pad // pack) * kp * 4              # ids
            + pack * V * pack * D * dt.itemsize     # block-diag table
            + kp * pack * V * 4                     # replication matrix
        ),
    )

    out2d = pl.pallas_call(
        _embed_onehot_kernel,
        out_shape=jax.ShapeDtypeStruct((n_pad // pack, pack * D), dt),
        grid=grid,
        in_specs=[
            pl.BlockSpec((rb, kp), lambda i: (i, 0)),                 # ids tile per step
            pl.BlockSpec((kp, pack * V), lambda i: (0, 0)),           # replication matrix (resident)
            pl.BlockSpec((pack * V, pack * D), lambda i: (0, 0)),     # block-diag table (resident)
        ],
        out_specs=pl.BlockSpec((rb, pack * D), lambda i: (i, 0)),     # lane-dense output
        compiler_params=pltpu.CompilerParams(
            dimension_semantics=("parallel",),     # disjoint output blocks -> megacore on v7x
        ),
        cost_estimate=cost,
    )(ids2d, rep, table_bd)

    # (n_pad//pack, pack*D) has the same row-major bytes as (n_pad, D).
    return out2d.reshape(n_pad, D)[:n]   # == embedding(inputs).view(-1, D)


if __name__ == "__main__":
    # Small deterministic setup consistent with the module:
    #   authors (vocab) = 64, args.author_embed_size = 32, inputs = (batch=2, seq=8) ids
    key = jax.random.PRNGKey(0)
    k_tab, k_ids, k_big = jax.random.split(key, 3)

    num_authors = 64
    embed_size = 32

    # nn.Embedding default init: N(0, 1)
    table = jax.random.normal(k_tab, (num_authors, embed_size), dtype=jnp.float32)
    inputs = jax.random.randint(k_ids, (2, 8), minval=0, maxval=num_authors, dtype=jnp.int32)

    out = jax.block_until_ready(author_layer_forward(inputs, table))

    # Reference check against plain-JAX gather + reshape
    ref = jnp.take(table, inputs.reshape(-1), axis=0)
    assert out.shape == (inputs.size, embed_size)
    assert jnp.allclose(out, ref), "mismatch vs reference embedding lookup (small)"

    # Larger check exercising the multi-grid-step path (grid > 1).
    big_inputs = jax.random.randint(k_big, (4, 1000), minval=0, maxval=num_authors,
                                    dtype=jnp.int32)
    big_out = jax.block_until_ready(author_layer_forward(big_inputs, table))
    big_ref = jnp.take(table, big_inputs.reshape(-1), axis=0)
    assert big_out.shape == (big_inputs.size, embed_size)
    assert jnp.allclose(big_out, big_ref), "mismatch vs reference embedding lookup (large)"

    print("KERNEL_OK")
</pallas_src>

<mosaic_0001>
module attributes {stable_mosaic.version = 11 : i64} {
  func.func @_embed_onehot_kernel(%arg0: i32, %arg1: memref<8x8xi32, #tpu.memory_space<vmem>>, %arg2: memref<8x256xf32, #tpu.memory_space<vmem>>, %arg3: memref<256x128xf32, #tpu.memory_space<vmem>>, %arg4: memref<8x128xf32, #tpu.memory_space<vmem>>) attributes {dimension_semantics = [#tpu.dimension_semantics<parallel>], iteration_bounds = array<i64: 1>, scalar_prefetch = 0 : i64, scratch_operands = 0 : i64, tpu.core_type = #tpu.core_type<tc>, window_params = [{transform_indices = @transform_0, window_bounds = array<i64: 8, 8>}, {pipeline_mode = #tpu.pipeline_mode<synchronous>, transform_indices = @transform_1, window_bounds = array<i64: 8, 256>}, {pipeline_mode = #tpu.pipeline_mode<synchronous>, transform_indices = @transform_2, window_bounds = array<i64: 256, 128>}, {transform_indices = @transform_3, window_bounds = array<i64: 8, 128>}]} {
    %c0 = arith.constant 0 : index
    %c0_0 = arith.constant 0 : index
    %0 = vector.load %arg1[%c0, %c0_0] : memref<8x8xi32, #tpu.memory_space<vmem>>, vector<8x8xi32>
    %1 = arith.sitofp %0 : vector<8x8xi32> to vector<8x8xf32>
    %c0_1 = arith.constant 0 : index
    %c0_2 = arith.constant 0 : index
    %2 = vector.load %arg2[%c0_1, %c0_2] : memref<8x256xf32, #tpu.memory_space<vmem>>, vector<8x256xf32>
    %cst = arith.constant dense<0.000000e+00> : vector<8x256xf32>
    %3 = tpu.matmul %1, %2, %cst {dimension_numbers = #tpu.dot_dimension_numbers<[1], [0], [0], [1], [0, 0, 1, 1], [], []>} : vector<8x8xf32>, vector<8x256xf32>, vector<8x256xf32> -> vector<8x256xf32>
    %4 = tpu.iota {dimensions = array<i32: 1>} : vector<8x256xi32>
    %5 = arith.fptosi %3 : vector<8x256xf32> to vector<8x256xi32>
    %6 = arith.cmpi eq, %4, %5 : vector<8x256xi32>
    %7 = arith.extui %6 : vector<8x256xi1> to vector<8x256xi32>
    %8 = arith.sitofp %7 : vector<8x256xi32> to vector<8x256xf32>
    %c0_3 = arith.constant 0 : index
    %c0_4 = arith.constant 0 : index
    %9 = vector.load %arg3[%c0_3, %c0_4] : memref<256x128xf32, #tpu.memory_space<vmem>>, vector<256x128xf32>
    %cst_5 = arith.constant dense<0.000000e+00> : vector<8x128xf32>
    %10 = tpu.matmul %8, %9, %cst_5 {dimension_numbers = #tpu.dot_dimension_numbers<[1], [0], [0], [1], [0, 0, 1, 1], [], []>} : vector<8x256xf32>, vector<256x128xf32>, vector<8x128xf32> -> vector<8x128xf32>
    %c0_6 = arith.constant 0 : index
    %c0_7 = arith.constant 0 : index
    %11 = vector.load %arg4[%c0_6, %c0_7] : memref<8x128xf32, #tpu.memory_space<vmem>>, vector<8x128xf32>
    tpu.vector_store %arg4[%c0_6, %c0_7], %10 {strides = array<i32>} : memref<8x128xf32, #tpu.memory_space<vmem>>, vector<8x128xf32>,
    return
  }
  func.func @transform_0(%arg0: i32) -> (i32, i32) {
    %c0_i32 = arith.constant 0 : i32
    %c0_i32_0 = arith.constant 0 : i32
    return %arg0, %c0_i32 : i32, i32
  }
  func.func @transform_1(%arg0: i32) -> (i32, i32) {
    %c0_i32 = arith.constant 0 : i32
    %c0_i32_0 = arith.constant 0 : i32
    %c0_i32_1 = arith.constant 0 : i32
    return %c0_i32, %c0_i32_0 : i32, i32
  }
  func.func @transform_2(%arg0: i32) -> (i32, i32) {
    %c0_i32 = arith.constant 0 : i32
    %c0_i32_0 = arith.constant 0 : i32
    %c0_i32_1 = arith.constant 0 : i32
    return %c0_i32, %c0_i32_0 : i32, i32
  }
  func.func @transform_3(%arg0: i32) -> (i32, i32) {
    %c0_i32 = arith.constant 0 : i32
    %c0_i32_0 = arith.constant 0 : i32
    return %arg0, %c0_i32 : i32, i32
  }
}

</mosaic_0001>

<llo_original>
// kernel: tpu_custom_call.1
$region0: #{tpu_custom_call.1}
  #allocation0 [shape = 'u32[]', space=smem, size = 0x4, offset = 0x4, fixed_abs, tag = 'smem constant byte address 0x4 - core index']
  #allocation1 [shape = 'u32[144,128]{1,0:T(1,128)}', space=vmem, size = 0x12000, scoped, tag = 'internal scratch']
  %s0 = inlined_call_operand.hbm [shape: s32[8,8], index: 0, kind: input, shape index: {}]
  %s1 = inlined_call_operand.hbm [shape: f32[8,256], index: 1, kind: input, shape index: {}]
  %s2 = inlined_call_operand.hbm [shape: f32[256,128], index: 2, kind: input, shape index: {}]
  %s3 = inlined_call_operand.hbm [shape: f32[8,128], index: 3, kind: output, shape index: {}]
  %s4 = sld [smem:[#allocation0]]
  $region34: #{tpu_custom_call.1} parent=0
    _
  %s6 = ssub.s32 1, %s4
  %s7 = scalar_select 0, %s6, %s4
  $region1: #{tpu_custom_call.1} parent=0
    #allocation2 [shape = 'u8[4096]{0}', space=vmem, size = 0x1000, scoped, tag = 'input window, operand 0, single buffered']
    #allocation3 [shape = 's32[1]{0}', space=sflag, size = 0x4, scoped, tag = 'scoped memory for tpu_custom_call.1']
    #allocation4 [shape = 's32[1]{0}', space=sflag, size = 0x4, scoped, tag = 'scoped memory for tpu_custom_call.1']
    #allocation5 [shape = 'u8[8192]{0}', space=vmem, size = 0x2000, scoped, tag = 'input window, operand 1, single buffered']
    #allocation6 [shape = 's32[1]{0}', space=sflag, size = 0x4, scoped, tag = 'scoped memory for tpu_custom_call.1']
    #allocation7 [shape = 'u8[131072]{0}', space=vmem, size = 0x20000, scoped, tag = 'input window, operand 2, single buffered']
    #allocation8 [shape = 'u8[4096]{0}', space=vmem, size = 0x1000, scoped, tag = 'output window, operand 0, single buffered']
    %8 = vsyncpa [#allocation3], 0
    %9 = vsyncpa [#allocation6], 0
    %10 = vsyncpa [#allocation4], 0
    // Predicated region
    $region2: #{tpu_custom_call.1} parent=1 // pred_check
      _
    $region3: #{tpu_custom_call.1} parent=1 // pred_check_branch
      %12 = sbr.rel (0) target = $region5
    $region4: #{tpu_custom_call.1} parent=1 // pred_region
      %s14 = ssub.s32 128, 128
      %15 = vsyncadd [#allocation3], %s14
      %s17 = sshll.u32 [#allocation2], 4
      %s18 = int_to_ptr.vmem [resolvable:$true] %s17
      %20 = dma.hbm_to_vmem [thread:$0]  %s0, 128, %s18, [#allocation3]
    $region5: #{tpu_custom_call.1} parent=1 // pred_fallthru
      _
    // Predicated region
    $region6: #{tpu_custom_call.1} parent=1 // pred_check
      _
    $region7: #{tpu_custom_call.1} parent=1 // pred_check_branch
      %22 = sbr.rel (0) target = $region9
    $region8: #{tpu_custom_call.1} parent=1 // pred_region
      %s24 = ssub.s32 256, 256
      %25 = vsyncadd [#allocation6], %s24
      %s27 = sshll.u32 [#allocation5], 4
      %s28 = int_to_ptr.vmem [resolvable:$true] %s27
      %30 = dma.hbm_to_vmem [thread:$0]  %s1, 256, %s28, [#allocation6]
    $region9: #{tpu_custom_call.1} parent=1 // pred_fallthru
      _
    // Predicated region
    $region10: #{tpu_custom_call.1} parent=1 // pred_check
      _
    $region11: #{tpu_custom_call.1} parent=1 // pred_check_branch
      %32 = sbr.rel (0) target = $region13
    $region12: #{tpu_custom_call.1} parent=1 // pred_region
      %s34 = ssub.s32 4096, 4096
      %35 = vsyncadd [#allocation6], %s34
      %s36 = sshll.u32 [#allocation7], 4
      %s37 = int_to_ptr.vmem [resolvable:$true] %s36
      %42 = dma.hbm_to_vmem [thread:$0]  %s2, 4096, %s37, [#allocation6], 128, 128, 8
    $region13: #{tpu_custom_call.1} parent=1 // pred_fallthru
      _
    // Predicated region
    $region14: #{tpu_custom_call.1} parent=1 // pred_check
      _
    $region15: #{tpu_custom_call.1} parent=1 // pred_check_branch
      %44 = sbr.rel (0) target = $region17
    $region16: #{tpu_custom_call.1} parent=1 // pred_region
      %45 = dma.done [#allocation3], 128
    $region17: #{tpu_custom_call.1} parent=1 // pred_fallthru
      _
    // Predicated region
    $region18: #{tpu_custom_call.1} parent=1 // pred_check
      _
    $region19: #{tpu_custom_call.1} parent=1 // pred_check_branch
      %47 = sbr.rel (0) target = $region21
    $region20: #{tpu_custom_call.1} parent=1 // pred_region
      %48 = dma.done [#allocation6], 256
    $region21: #{tpu_custom_call.1} parent=1 // pred_fallthru
      _
    // Predicated region
    $region22: #{tpu_custom_call.1} parent=1 // pred_check
      _
    $region23: #{tpu_custom_call.1} parent=1 // pred_check_branch
      %50 = sbr.rel (0) target = $region25
    $region24: #{tpu_custom_call.1} parent=1 // pred_region
      %51 = dma.done [#allocation6], 4096
    $region25: #{tpu_custom_call.1} parent=1 // pred_fallthru
      _
    %v52 = vld [vmem:[#allocation2] sm:$0xff]
    %v53 = vcvt.s32.f32 %v52
    %v54 = vld [vmem:[#allocation5] sm:$0xff]
    %v55 = vld [vmem:[#allocation5 + $0x8] sm:$0xff]
    %vm56 = vcmask 64512
    %v58 = vsel %vm56, %v53, 0
    %60 = vmatprep.subr.mxu0 %v55
    %61 = vmatpush1.msra.mxu0 %v54
    %62 = vmatprep.subr.mxu0 0.0
    %63 = vmatpush1.msra.mxu0 0.0
    %64 = vmatprep.subr.mxu0 0.0
    %65 = vmatpush1.msra.mxu0 0.0
    %66 = vmatprep.subr.mxu0 0.0
    %67 = vmatpush1.msra.mxu0 0.0
    %68 = vmatprep.subr.mxu0 0.0
    %69 = vmatpush1.msra.mxu0 0.0
    %70 = vmatprep.subr.mxu0 0.0
    %71 = vmatpush1.msra.mxu0 0.0
    %72 = vmatprep.subr.mxu0 0.0
    %73 = vmatpush1.msra.mxu0 0.0
    %74 = vmatprep.subr.mxu0 0.0
    %75 = vmatpush1.msra.mxu0 0.0
    %76 = vmatprep.subr.mxu0 0.0
    %77 = vmatpush1.msra.mxu0 0.0
    %78 = vmatprep.subr.mxu0 0.0
    %79 = vmatpush1.msra.mxu0 0.0
    %80 = vmatprep.subr.mxu0 0.0
    %81 = vmatpush1.msra.mxu0 0.0
    %82 = vmatprep.subr.mxu0 0.0
    %83 = vmatpush1.msra.mxu0 0.0
    %84 = vmatprep.subr.mxu0 0.0
    %85 = vmatpush1.msra.mxu0 0.0
    %86 = vmatprep.subr.mxu0 0.0
    %87 = vmatpush1.msra.mxu0 0.0
    %88 = vmatprep.subr.mxu0 0.0
    %89 = vmatpush1.msra.mxu0 0.0
    %90 = vmatprep.subr.mxu0 0.0
    %91 = vmatpush1.msra.mxu0 0.0
    %92 = vmatprep.subr.mxu0 0.0
    %93 = vmatpush1.msra.mxu0 0.0
    %94 = vmatprep.subr.mxu0 0.0
    %95 = vmatpush1.msra.mxu0 0.0
    %96 = vmatprep.subr.mxu0 0.0
    %97 = vmatpush1.msra.mxu0 0.0
    %98 = vmatprep.subr.mxu0 0.0
    %99 = vmatpush1.msra.mxu0 0.0
    %100 = vmatprep.subr.mxu0 0.0
    %101 = vmatpush1.msra.mxu0 0.0
    %102 = vmatprep.subr.mxu0 0.0
    %103 = vmatpush1.msra.mxu0 0.0
    %104 = vmatprep.subr.mxu0 0.0
    %105 = vmatpush1.msra.mxu0 0.0
    %106 = vmatprep.subr.mxu0 0.0
    %107 = vmatpush1.msra.mxu0 0.0
    %108 = vmatprep.subr.mxu0 0.0
    %109 = vmatpush1.msra.mxu0 0.0
    %110 = vmatprep.subr.mxu0 0.0
    %111 = vmatpush1.msra.mxu0 0.0
    %112 = vmatprep.subr.mxu0 0.0
    %113 = vmatpush1.msra.mxu0 0.0
    %114 = vmatprep.subr.mxu0 0.0
    %115 = vmatpush1.msra.mxu0 0.0
    %116 = vmatprep.subr.mxu0 0.0
    %117 = vmatpush1.msra.mxu0 0.0
    %118 = vmatprep.subr.mxu0 0.0
    %119 = vmatpush1.msra.mxu0 0.0
    %120 = vmatprep.subr.mxu0 0.0
    %121 = vmatpush1.msra.mxu0 0.0
    %122 = vmatprep.subr.mxu0 0.0
    %123 = vmatpush1.msra.mxu0 0.0
    %124 = vmatprep.mubr.f32.mxu0 0.0
    %125 = vmatmul.mubr.f32.gmra.mrb[0].mxu0 %v58
    %v126 = vpop.f32.mrb[0].mxu0
    %v127 = vadd.f32 0.0, %v126
    %v128 = vpop.f32.mrb[0].mxu0
    %v129 = vadd.f32 0.0, %v128
    %130 = vdwg.mxu0
    %v131 = vlaneseq
    %v132 = vand.u32 %v131, 127
    %v133 = vadd.s32 %v132, 128
    %v134 = vcvt.f32.s32.to.zero.pseudo %v127
    %v135 = vcvt.f32.s32.to.zero.pseudo %v129
    %vm136 = vcmp.eq.s32.totalorder %v132, %v134
    %vm137 = vcmp.eq.s32.totalorder %v133, %v135
    %v138 = vsel %vm136, 1, 0
    %v139 = vsel %vm137, 1, 0
    %v140 = vcvt.s32.f32 %v138
    %v141 = vcvt.s32.f32 %v139
    %v142 = vld [vmem:[#allocation7] sm:$0xff]
    %v143 = vld [vmem:[#allocation7 + $0x8] sm:$0xff]
    %v144 = vld [vmem:[#allocation7 + $0x10] sm:$0xff]
    %v145 = vld [vmem:[#allocation7 + $0x18] sm:$0xff]
    %v146 = vld [vmem:[#allocation7 + $0x20] sm:$0xff]
    %v147 = vld [vmem:[#allocation7 + $0x28] sm:$0xff]
    %v148 = vld [vmem:[#allocation7 + $0x30] sm:$0xff]
    %v149 = vld [vmem:[#allocation7 + $0x38] sm:$0xff]
    %v150 = vld [vmem:[#allocation7 + $0x40] sm:$0xff]
    %v151 = vld [vmem:[#allocation7 + $0x48] sm:$0xff]
    %v152 = vld [vmem:[#allocation7 + $0x50] sm:$0xff]
    %v153 = vld [vmem:[#allocation7 + $0x58] sm:$0xff]
    %v154 = vld [vmem:[#allocation7 + $0x60] sm:$0xff]
    %v155 = vld [vmem:[#allocation7 + $0x68] sm:$0xff]
    %v156 = vld [vmem:[#allocation7 + $0x70] sm:$0xff]
    %v157 = vld [vmem:[#allocation7 + $0x78] sm:$0xff]
    %v158 = vld [vmem:[#allocation7 + $0x80] sm:$0xff]
    %v159 = vld [vmem:[#allocation7 + $0x88] sm:$0xff]
    %v160 = vld [vmem:[#allocation7 + $0x90] sm:$0xff]
    %v161 = vld [vmem:[#allocation7 + $0x98] sm:$0xff]
    %v162 = vld [vmem:[#allocation7 + $0xa0] sm:$0xff]
    %v163 = vld [vmem:[#allocation7 + $0xa8] sm:$0xff]
    %v164 = vld [vmem:[#allocation7 + $0xb0] sm:$0xff]
    %v165 = vld [vmem:[#allocation7 + $0xb8] sm:$0xff]
    %v166 = vld [vmem:[#allocation7 + $0xc0] sm:$0xff]
    %v167 = vld [vmem:[#allocation7 + $0xc8] sm:$0xff]
    %v168 = vld [vmem:[#allocation7 + $0xd0] sm:$0xff]
    %v169 = vld [vmem:[#allocation7 + $0xd8] sm:$0xff]
    %v170 = vld [vmem:[#allocation7 + $0xe0] sm:$0xff]
    %v171 = vld [vmem:[#allocation7 + $0xe8] sm:$0xff]
    %v172 = vld [vmem:[#allocation7 + $0xf0] sm:$0xff]
    %v173 = vld [vmem:[#allocation7 + $0xf8] sm:$0xff]
    %174 = vmatprep.subr.mxu0 0.0
    %175 = vmatpush1.msra.mxu0 %v142
    %176 = vmatprep.subr.mxu0 0.0
    %177 = vmatpush1.msra.mxu0 %v143
    %178 = vmatprep.subr.mxu0 0.0
    %179 = vmatpush1.msra.mxu0 %v144
    %180 = vmatprep.subr.mxu0 0.0
    %181 = vmatpush1.msra.mxu0 %v145
    %182 = vmatprep.subr.mxu0 0.0
    %183 = vmatpush1.msra.mxu0 %v146
    %184 = vmatprep.subr.mxu0 0.0
    %185 = vmatpush1.msra.mxu0 %v147
    %186 = vmatprep.subr.mxu0 0.0
    %187 = vmatpush1.msra.mxu0 %v148
    %188 = vmatprep.subr.mxu0 0.0
    %189 = vmatpush1.msra.mxu0 %v149
    %190 = vmatprep.subr.mxu0 0.0
    %191 = vmatpush1.msra.mxu0 %v150
    %192 = vmatprep.subr.mxu0 0.0
    %193 = vmatpush1.msra.mxu0 %v151
    %194 = vmatprep.subr.mxu0 0.0
    %195 = vmatpush1.msra.mxu0 %v152
    %196 = vmatprep.subr.mxu0 0.0
    %197 = vmatpush1.msra.mxu0 %v153
    %198 = vmatprep.subr.mxu0 0.0
    %199 = vmatpush1.msra.mxu0 %v154
    %200 = vmatprep.subr.mxu0 0.0
    %201 = vmatpush1.msra.mxu0 %v155
    %202 = vmatprep.subr.mxu0 0.0
    %203 = vmatpush1.msra.mxu0 %v156
    %204 = vmatprep.subr.mxu0 0.0
    %205 = vmatpush1.msra.mxu0 %v157
    %206 = vmatprep.subr.mxu0 0.0
    %207 = vmatpush1.msra.mxu0 %v158
    %208 = vmatprep.subr.mxu0 0.0
    %209 = vmatpush1.msra.mxu0 %v159
    %210 = vmatprep.subr.mxu0 0.0
    %211 = vmatpush1.msra.mxu0 %v160
    %212 = vmatprep.subr.mxu0 0.0
    %213 = vmatpush1.msra.mxu0 %v161
    %214 = vmatprep.subr.mxu0 0.0
    %215 = vmatpush1.msra.mxu0 %v162
    %216 = vmatprep.subr.mxu0 0.0
    %217 = vmatpush1.msra.mxu0 %v163
    %218 = vmatprep.subr.mxu0 0.0
    %219 = vmatpush1.msra.mxu0 %v164
    %220 = vmatprep.subr.mxu0 0.0
    %221 = vmatpush1.msra.mxu0 %v165
    %222 = vmatprep.subr.mxu0 0.0
    %223 = vmatpush1.msra.mxu0 %v166
    %224 = vmatprep.subr.mxu0 0.0
    %225 = vmatpush1.msra.mxu0 %v167
    %226 = vmatprep.subr.mxu0 0.0
    %227 = vmatpush1.msra.mxu0 %v168
    %228 = vmatprep.subr.mxu0 0.0
    %229 = vmatpush1.msra.mxu0 %v169
    %230 = vmatprep.subr.mxu0 0.0
    %231 = vmatpush1.msra.mxu0 %v170
    %232 = vmatprep.subr.mxu0 0.0
    %233 = vmatpush1.msra.mxu0 %v171
    %234 = vmatprep.subr.mxu0 0.0
    %235 = vmatpush1.msra.mxu0 %v172
    %236 = vmatprep.subr.mxu0 0.0
    %237 = vmatpush1.msra.mxu0 %v173
    %238 = vmatprep.mubr.f32.mxu0 %v141
    %239 = vmatmul.mubr.f32.gmra.mrb[0].mxu0 %v140
    %v240 = vpop.f32.mrb[0].mxu0
    %v241 = vadd.f32 0.0, %v240
    %v242 = vpop.f32.mrb[0].mxu0
    %243 = vdwg.mxu0
    %244 = vst [vmem:[#allocation8] sm:$0xff] %v241
    // Predicated region
    $region26: #{tpu_custom_call.1} parent=1 // pred_check
      _
    $region27: #{tpu_custom_call.1} parent=1 // pred_check_branch
      %246 = sbr.rel (0) target = $region29
    $region28: #{tpu_custom_call.1} parent=1 // pred_region
      %s248 = ssub.s32 128, 128
      %249 = vsyncadd [#allocation4], %s248
      %s251 = sshll.u32 [#allocation8], 4
      %s252 = int_to_ptr.vmem [resolvable:$true] %s251
      %254 = dma.vmem_to_hbm [thread:$0]  %s252, 128, %s3, [#allocation4]
    $region29: #{tpu_custom_call.1} parent=1 // pred_fallthru
      _
    // Predicated region
    $region30: #{tpu_custom_call.1} parent=1 // pred_check
      _
    $region31: #{tpu_custom_call.1} parent=1 // pred_check_branch
      %256 = sbr.rel (0) target = $region33
    $region32: #{tpu_custom_call.1} parent=1 // pred_region
      %257 = dma.done [#allocation4], 128
    $region33: #{tpu_custom_call.1} parent=1 // pred_fallthru
      _
    %258 = vsyncpa [#allocation3], 1
    %259 = vsyncpa [#allocation6], 1
    %260 = vsyncpa [#allocation4], 1

</llo_original>
